<compile_context>
chip_gen: v7x
topology: tpu7x:2x2x1
jax: 0.10.0
libtpu: 0.0.40
codegen_flags: <defaults>
</compile_context>

<pallas_src>
import jax
import jax.numpy as jnp
from jax.experimental import pallas as pl
from jax.experimental.pallas import tpu as pltpu


def build_grid(resolution, vmin=-1.0, vmax=1.0):
    """4-channel positional grid, shape (1, H, W, 4): [y, x, -y, -x] style."""
    ranges = [jnp.linspace(vmin, vmax, num=r, dtype=jnp.float32) for r in resolution]
    yy, xx = jnp.meshgrid(*ranges, indexing="ij")                   # (H, W)
    grid = jnp.stack([yy, xx], axis=-1)                             # (H, W, 2)
    grid = jnp.concatenate([grid, (vmin + vmax) - grid], axis=-1)   # (H, W, 4)
    return grid[None]                                               # (1, H, W, 4)


def _fused_kernel(grid_ref, w_ref, bias_ref, x_ref, o_ref):
    # grid_ref: (th, W, 4) f32   -- positional-grid rows for this H tile
    # w_ref:    (4, C)     f32   -- Conv2d(4, C, k=1) weight, transposed
    # bias_ref: (1, C)     f32
    # x_ref/o_ref: (1, th, W, C) in the input dtype
    g = grid_ref[...]                                     # (th, W, 4)
    w = w_ref[...]                                        # (4, C)
    # f32 accumulate; single downcast at the end (correct for bf16 inputs too).
    acc = x_ref[0].astype(jnp.float32) + bias_ref[...][None]        # (th, W, C)
    for k in range(4):                                    # K=4: unrolled VPU FMAs
        acc = acc + g[:, :, k:k + 1] * w[k:k + 1, :][None]
    o_ref[0] = acc.astype(o_ref.dtype)


def _choose_h_tile(H, W, C, itemsize, target_bytes=2 << 20):
    """Rows of H per block so one x block is ~2 MiB (VMEM-safe on all gens)."""
    per_row = W * C * itemsize
    return int(min(H, max(1, target_bytes // per_row)))


def soft_position_embed(inputs_nhwc, grid_hw4, weight, bias):
    """inputs_nhwc: (B, H, W, C); grid_hw4: (H, W, 4); weight: (C, 4); bias: (C,)."""
    B, H, W, C = inputs_nhwc.shape
    th = _choose_h_tile(H, W, C, inputs_nhwc.dtype.itemsize)
    n_t = pl.cdiv(H, th)

    g = grid_hw4.astype(jnp.float32)                 # (H, W, 4)
    w_t = weight.T.astype(jnp.float32)               # (4, C)
    b2 = bias.reshape(1, C).astype(jnp.float32)      # (1, C)

    return pl.pallas_call(
        _fused_kernel,
        out_shape=jax.ShapeDtypeStruct((B, H, W, C), inputs_nhwc.dtype),
        grid_spec=pltpu.PrefetchScalarGridSpec(
            num_scalar_prefetch=0,
            grid=(n_t, B),                           # H-tiles outer, batch inner:
            in_specs=[                               # grid/w/bias block indices are
                pl.BlockSpec((th, W, 4), lambda t, b: (t, 0, 0)),   # constant across
                pl.BlockSpec((4, C), lambda t, b: (0, 0)),          # the inner B steps
                pl.BlockSpec((1, C), lambda t, b: (0, 0)),          # -> no re-DMA.
                pl.BlockSpec((1, th, W, C), lambda t, b: (b, t, 0, 0)),
            ],
            out_specs=pl.BlockSpec((1, th, W, C), lambda t, b: (b, t, 0, 0)),
        ),
        compiler_params=pltpu.CompilerParams(
            # No cross-step carried state -> both axes parallel (megacore sharding).
            dimension_semantics=("parallel", "parallel"),
            # ~2 MiB x/o blocks double-buffered + tiny grid/w/bias + f32 temps
            # stay well under 32 MiB; safe on v7x (64 MiB physical VMEM) too.
            vmem_limit_bytes=32 * 1024 * 1024,
        ),
    )(g, w_t, b2, inputs_nhwc)


def soft_position_embed_ref(inputs_nhwc, grid_hw4, weight, bias):
    """Pure-JAX reference (PyTorch 1x1 Conv2d on the grid + channels_last add)."""
    emb = jnp.einsum(
        "hwk,ck->hwc", grid_hw4, weight, precision=jax.lax.Precision.HIGHEST
    ) + bias
    return inputs_nhwc + emb[None]


if __name__ == "__main__":
    key = jax.random.PRNGKey(0)
    B, hidden = 2, 32
    resolution = (16, 16)
    H, W = resolution

    k_x, k_w, k_b = jax.random.split(key, 3)
    # nn.Conv2d(4, hidden, kernel_size=1) -> weight (hidden, 4), bias (hidden,)
    weight = jax.random.normal(k_w, (hidden, 4), dtype=jnp.float32) * 0.1
    bias = jax.random.normal(k_b, (hidden,), dtype=jnp.float32) * 0.1

    # channels_last inputs, as in forward(..., channels_last=True)
    x = jax.random.normal(k_x, (B, H, W, hidden), dtype=jnp.float32)

    grid4 = build_grid(resolution, vmin=-1.0, vmax=1.0)[0]   # (H, W, 4)

    out = soft_position_embed(x, grid4, weight, bias)
    out = jax.block_until_ready(out)

    ref = soft_position_embed_ref(x, grid4, weight, bias)
    assert out.shape == (B, H, W, hidden)
    assert jnp.allclose(out, ref, atol=1e-5, rtol=1e-5)
    print("KERNEL_OK")
</pallas_src>

<mosaic_0001>
module attributes {stable_mosaic.version = 11 : i64} {
  func.func @_fused_kernel(%arg0: i32, %arg1: i32, %arg2: memref<16x16x4xf32, #tpu.memory_space<vmem>>, %arg3: memref<4x32xf32, #tpu.memory_space<vmem>>, %arg4: memref<1x32xf32, #tpu.memory_space<vmem>>, %arg5: memref<1x16x16x32xf32, #tpu.memory_space<vmem>>, %arg6: memref<1x16x16x32xf32, #tpu.memory_space<vmem>>) attributes {dimension_semantics = [#tpu.dimension_semantics<parallel>, #tpu.dimension_semantics<parallel>], iteration_bounds = array<i64: 1, 2>, scalar_prefetch = 0 : i64, scratch_operands = 0 : i64, tpu.core_type = #tpu.core_type<tc>, window_params = [{transform_indices = @transform_0, window_bounds = array<i64: 16, 16, 4>}, {pipeline_mode = #tpu.pipeline_mode<synchronous>, transform_indices = @transform_1, window_bounds = array<i64: 4, 32>}, {pipeline_mode = #tpu.pipeline_mode<synchronous>, transform_indices = @transform_2, window_bounds = array<i64: 1, 32>}, {transform_indices = @transform_3, window_bounds = array<i64: 1, 16, 16, 32>}, {transform_indices = @transform_4, window_bounds = array<i64: 1, 16, 16, 32>}]} {
    %c0 = arith.constant 0 : index
    %c0_0 = arith.constant 0 : index
    %c0_1 = arith.constant 0 : index
    %0 = vector.load %arg2[%c0, %c0_0, %c0_1] : memref<16x16x4xf32, #tpu.memory_space<vmem>>, vector<16x16x4xf32>
    %c0_2 = arith.constant 0 : index
    %c0_3 = arith.constant 0 : index
    %1 = vector.load %arg3[%c0_2, %c0_3] : memref<4x32xf32, #tpu.memory_space<vmem>>, vector<4x32xf32>
    %c0_4 = arith.constant 0 : index
    %c0_5 = arith.constant 0 : index
    %c0_6 = arith.constant 0 : index
    %c0_7 = arith.constant 0 : index
    %2 = vector.load %arg5[%c0_4, %c0_5, %c0_6, %c0_7] : memref<1x16x16x32xf32, #tpu.memory_space<vmem>>, vector<1x16x16x32xf32>
    %3 = vector.shape_cast %2 : vector<1x16x16x32xf32> to vector<16x16x32xf32>
    %c0_8 = arith.constant 0 : index
    %c0_9 = arith.constant 0 : index
    %4 = vector.load %arg4[%c0_8, %c0_9] : memref<1x32xf32, #tpu.memory_space<vmem>>, vector<1x32xf32>
    %5 = vector.shape_cast %4 : vector<1x32xf32> to vector<1x1x32xf32>
    %6 = vector.broadcast %5 : vector<1x1x32xf32> to vector<16x16x32xf32>
    %7 = arith.addf %3, %6 : vector<16x16x32xf32>
    %8 = vector.extract_strided_slice %0 {offsets = [0, 0, 0], sizes = [16, 16, 1], strides = [1, 1, 1]} : vector<16x16x4xf32> to vector<16x16x1xf32>
    %9 = vector.extract_strided_slice %1 {offsets = [0, 0], sizes = [1, 32], strides = [1, 1]} : vector<4x32xf32> to vector<1x32xf32>
    %10 = vector.shape_cast %9 : vector<1x32xf32> to vector<1x1x32xf32>
    %11 = vector.broadcast %8 : vector<16x16x1xf32> to vector<16x16x32xf32>
    %12 = vector.broadcast %10 : vector<1x1x32xf32> to vector<16x16x32xf32>
    %13 = arith.mulf %11, %12 : vector<16x16x32xf32>
    %14 = arith.addf %7, %13 : vector<16x16x32xf32>
    %15 = vector.extract_strided_slice %0 {offsets = [0, 0, 1], sizes = [16, 16, 1], strides = [1, 1, 1]} : vector<16x16x4xf32> to vector<16x16x1xf32>
    %16 = vector.extract_strided_slice %1 {offsets = [1, 0], sizes = [1, 32], strides = [1, 1]} : vector<4x32xf32> to vector<1x32xf32>
    %17 = vector.shape_cast %16 : vector<1x32xf32> to vector<1x1x32xf32>
    %18 = vector.broadcast %15 : vector<16x16x1xf32> to vector<16x16x32xf32>
    %19 = vector.broadcast %17 : vector<1x1x32xf32> to vector<16x16x32xf32>
    %20 = arith.mulf %18, %19 : vector<16x16x32xf32>
    %21 = arith.addf %14, %20 : vector<16x16x32xf32>
    %22 = vector.extract_strided_slice %0 {offsets = [0, 0, 2], sizes = [16, 16, 1], strides = [1, 1, 1]} : vector<16x16x4xf32> to vector<16x16x1xf32>
    %23 = vector.extract_strided_slice %1 {offsets = [2, 0], sizes = [1, 32], strides = [1, 1]} : vector<4x32xf32> to vector<1x32xf32>
    %24 = vector.shape_cast %23 : vector<1x32xf32> to vector<1x1x32xf32>
    %25 = vector.broadcast %22 : vector<16x16x1xf32> to vector<16x16x32xf32>
    %26 = vector.broadcast %24 : vector<1x1x32xf32> to vector<16x16x32xf32>
    %27 = arith.mulf %25, %26 : vector<16x16x32xf32>
    %28 = arith.addf %21, %27 : vector<16x16x32xf32>
    %29 = vector.extract_strided_slice %0 {offsets = [0, 0, 3], sizes = [16, 16, 1], strides = [1, 1, 1]} : vector<16x16x4xf32> to vector<16x16x1xf32>
    %30 = vector.extract_strided_slice %1 {offsets = [3, 0], sizes = [1, 32], strides = [1, 1]} : vector<4x32xf32> to vector<1x32xf32>
    %31 = vector.shape_cast %30 : vector<1x32xf32> to vector<1x1x32xf32>
    %32 = vector.broadcast %29 : vector<16x16x1xf32> to vector<16x16x32xf32>
    %33 = vector.broadcast %31 : vector<1x1x32xf32> to vector<16x16x32xf32>
    %34 = arith.mulf %32, %33 : vector<16x16x32xf32>
    %35 = arith.addf %28, %34 : vector<16x16x32xf32>
    %c0_10 = arith.constant 0 : index
    %c0_11 = arith.constant 0 : index
    %c0_12 = arith.constant 0 : index
    %c0_13 = arith.constant 0 : index
    %36 = vector.load %arg6[%c0_10, %c0_11, %c0_12, %c0_13] : memref<1x16x16x32xf32, #tpu.memory_space<vmem>>, vector<1x16x16x32xf32>
    %37 = vector.shape_cast %36 : vector<1x16x16x32xf32> to vector<16x16x32xf32>
    %38 = vector.shape_cast %35 : vector<16x16x32xf32> to vector<1x16x16x32xf32>
    tpu.vector_store %arg6[%c0_10, %c0_11, %c0_12, %c0_13], %38 {strides = array<i32>} : memref<1x16x16x32xf32, #tpu.memory_space<vmem>>, vector<1x16x16x32xf32>,
    return
  }
  func.func @transform_0(%arg0: i32, %arg1: i32) -> (i32, i32, i32) {
    %c0_i32 = arith.constant 0 : i32
    %c0_i32_0 = arith.constant 0 : i32
    %c0_i32_1 = arith.constant 0 : i32
    return %arg0, %c0_i32, %c0_i32_0 : i32, i32, i32
  }
  func.func @transform_1(%arg0: i32, %arg1: i32) -> (i32, i32) {
    %c0_i32 = arith.constant 0 : i32
    %c0_i32_0 = arith.constant 0 : i32
    %c0_i32_1 = arith.constant 0 : i32
    return %c0_i32, %c0_i32_0 : i32, i32
  }
  func.func @transform_2(%arg0: i32, %arg1: i32) -> (i32, i32) {
    %c0_i32 = arith.constant 0 : i32
    %c0_i32_0 = arith.constant 0 : i32
    %c0_i32_1 = arith.constant 0 : i32
    return %c0_i32, %c0_i32_0 : i32, i32
  }
  func.func @transform_3(%arg0: i32, %arg1: i32) -> (i32, i32, i32, i32) {
    %c0_i32 = arith.constant 0 : i32
    %c0_i32_0 = arith.constant 0 : i32
    %c0_i32_1 = arith.constant 0 : i32
    return %arg1, %arg0, %c0_i32, %c0_i32_0 : i32, i32, i32, i32
  }
  func.func @transform_4(%arg0: i32, %arg1: i32) -> (i32, i32, i32, i32) {
    %c0_i32 = arith.constant 0 : i32
    %c0_i32_0 = arith.constant 0 : i32
    %c0_i32_1 = arith.constant 0 : i32
    return %arg1, %arg0, %c0_i32, %c0_i32_0 : i32, i32, i32, i32
  }
}

</mosaic_0001>

<llo_original>
// kernel: tpu_custom_call.1
$region0: #{tpu_custom_call.1}
  #allocation0 [shape = 'u32[]', space=smem, size = 0x4, offset = 0x4, fixed_abs, tag = 'smem constant byte address 0x4 - core index']
  #allocation1 [shape = 'u32[144,128]{1,0:T(1,128)}', space=vmem, size = 0x12000, scoped, tag = 'internal scratch']
  %s0 = inlined_call_operand.vmem [shape: f32[16,16,4], index: 0, kind: input, shape index: {}]
  %s1 = inlined_call_operand.vmem [shape: f32[4,32], index: 1, kind: input, shape index: {}]
  %s2 = inlined_call_operand.vmem [shape: f32[1,32], index: 2, kind: input, shape index: {}]
  %s3 = inlined_call_operand.hbm [shape: f32[2,16,16,32], index: 3, kind: input, shape index: {}]
  %s4 = inlined_call_operand.hbm [shape: f32[2,16,16,32], index: 4, kind: output, shape index: {}]
  %s5 = sld [smem:[#allocation0]]
  $region53: #{tpu_custom_call.1} parent=0
    _
  %s7 = ssub.s32 1, %s5
  %s8 = scalar_select 0, %s7, %s5
  $region1: #{tpu_custom_call.1} parent=0
    #allocation2 [shape = 'u8[262144]{0}', space=vmem, size = 0x40000, scoped, tag = 'input window, operand 3']
    #allocation3 [shape = 's32[2]{0}', space=sflag, size = 0x8, scoped, tag = 'scoped memory for tpu_custom_call.1']
    #allocation4 [shape = 's32[2]{0}', space=sflag, size = 0x8, scoped, tag = 'scoped memory for tpu_custom_call.1']
    #allocation5 [shape = 'u8[262144]{0}', space=vmem, size = 0x40000, scoped, tag = 'output window, operand 0']
    %9 = vsyncpa [#allocation3], 0
    %s10 = scalar_lea.sflag [#allocation3], 1
    %11 = vsyncpa %s10, 0
    %12 = vsyncpa [#allocation4], 0
    %s13 = scalar_lea.sflag [#allocation4], 1
    %14 = vsyncpa %s13, 0
    loop: start=0, step=1, limit=4
    $region2: #{tpu_custom_call.1} parent=1 // loop_pre_header
      _
    $region3: #{tpu_custom_call.1} parent=1 // loop_header
      %s16 = sphi 0, %s20
      %p17 = scmp.ge.s32.totalorder %s16, 4
      %s23 = sphi 0, %s35
      %s24 = sphi 0, %s31
      %s25 = sphi 0, %s23
      %s26 = sphi 0, %s24
      %s27 = sphi 0, %s25
      %s28 = sphi 0, %s26
      %s38 = sphi 0, %s40
      %s41 = sphi 0, %s38
      %s42 = sphi 0, %s41
      %s58 = sphi 0, %s42
      %s62 = sphi 0, %s62
      %s64 = sphi 0, %s62
      %s65 = sphi 0, %s64
      %s79 = sphi 0, %s65
      %s83 = sphi 0, %s83
      %s85 = sphi 0, %s83
      %s86 = sphi 0, %s85
      %s100 = sphi 0, %s86
      %s108 = sphi 0, %s110
      %s111 = sphi 0, %s108
      %s112 = sphi 0, %s111
      %s128 = sphi 0, %s112
      %s136 = sphi 0, %s138
      %s139 = sphi 0, %s136
      %s140 = sphi 0, %s139
      %s156 = sphi 0, %s140
    $region4: #{tpu_custom_call.1} parent=1 // loop_header_branch
      %19 = sbr.rel (%p17) target = $region8
    $region5: #{tpu_custom_call.1} parent=1 // loop_body
      %s21 = ssub.s32 %s16, 1
      %s22 = ssub.s32 %s16, 2
      %s29 = sadd.s32 1, %s24
      %p30 = scmp.ge.s32.totalorder %s29, 2
      %s31 = scalar_select %p30, 0, %s29
      %s32 = sadd.s32 1, %s23
      %s33 = scalar_select %p30, %s32, %s23
      %p34 = scmp.ge.s32.totalorder %s33, 1
      %s35 = scalar_select %p34, 0, %s33
      %s36 = ssub.s32 %s23, %s35
      %p37 = scmp.eq.s32.totalorder %s36, 0
      %s39 = sadd.s32 %s38, 1
      %s40 = scalar_select %p37, %s38, %s39
      %p43 = pneg %p37
      %p44 = scmp.eq.s32.totalorder %s16, 1
      %p45 = por %p43, %p44
      %p46 = scmp.ne.s32.totalorder %s38, %s41
      %p47 = scmp.eq.s32.totalorder %s16, 0
      %p48 = por %p46, %p47
      %p49 = scmp.ne.s32.totalorder %s38, %s41
      %p50 = scmp.eq.s32.totalorder %s21, 1
      %p51 = por %p49, %p50
      %p52 = scmp.ne.s32.totalorder %s41, %s42
      %p53 = scmp.eq.s32.totalorder %s21, 0
      %p54 = por %p52, %p53
      %p55 = scmp.ne.s32.totalorder %s41, %s42
      %p56 = scmp.eq.s32.totalorder %s22, 1
      %p57 = por %p55, %p56
      %p59 = scmp.ne.s32.totalorder %s42, %s58
      %p60 = scmp.eq.s32.totalorder %s22, 0
      %p61 = por %p59, %p60
      %s63 = sadd.s32 %s62, 1
      %p66 = scmp.eq.s32.totalorder %s16, 1
      %p67 = scmp.ne.s32.totalorder %s62, %s64
      %p68 = scmp.eq.s32.totalorder %s16, 0
      %p69 = por %p67, %p68
      %p70 = scmp.ne.s32.totalorder %s62, %s64
      %p71 = scmp.eq.s32.totalorder %s21, 1
      %p72 = por %p70, %p71
      %p73 = scmp.ne.s32.totalorder %s64, %s65
      %p74 = scmp.eq.s32.totalorder %s21, 0
      %p75 = por %p73, %p74
      %p76 = scmp.ne.s32.totalorder %s64, %s65
      %p77 = scmp.eq.s32.totalorder %s22, 1
      %p78 = por %p76, %p77
      %p80 = scmp.ne.s32.totalorder %s65, %s79
      %p81 = scmp.eq.s32.totalorder %s22, 0
      %p82 = por %p80, %p81
      %s84 = sadd.s32 %s83, 1
      %p87 = scmp.eq.s32.totalorder %s16, 1
      %p88 = scmp.ne.s32.totalorder %s83, %s85
      %p89 = scmp.eq.s32.totalorder %s16, 0
      %p90 = por %p88, %p89
      %p91 = scmp.ne.s32.totalorder %s83, %s85
      %p92 = scmp.eq.s32.totalorder %s21, 1
      %p93 = por %p91, %p92
      %p94 = scmp.ne.s32.totalorder %s85, %s86
      %p95 = scmp.eq.s32.totalorder %s21, 0
      %p96 = por %p94, %p95
      %p97 = scmp.ne.s32.totalorder %s85, %s86
      %p98 = scmp.eq.s32.totalorder %s22, 1
      %p99 = por %p97, %p98
      %p101 = scmp.ne.s32.totalorder %s86, %s100
      %p102 = scmp.eq.s32.totalorder %s22, 0
      %p103 = por %p101, %p102
      %s104 = ssub.s32 %s24, %s31
      %s105 = ssub.s32 %s23, %s35
      %s106 = sor.u32 %s104, %s105
      %p107 = scmp.eq.s32.totalorder %s106, 0
      %s109 = sadd.s32 %s108, 1
      %s110 = scalar_select %p107, %s108, %s109
      %p113 = pneg %p107
      %p114 = scmp.eq.s32.totalorder %s16, 1
      %p115 = por %p113, %p114
      %p116 = scmp.ne.s32.totalorder %s108, %s111
      %p117 = scmp.eq.s32.totalorder %s16, 0
      %p118 = por %p116, %p117
      %p119 = scmp.ne.s32.totalorder %s108, %s111
      %p120 = scmp.eq.s32.totalorder %s21, 1
      %p121 = por %p119, %p120
      %p122 = scmp.ne.s32.totalorder %s111, %s112
      %p123 = scmp.eq.s32.totalorder %s21, 0
      %p124 = por %p122, %p123
      %p125 = scmp.ne.s32.totalorder %s111, %s112
      %p126 = scmp.eq.s32.totalorder %s22, 1
      %p127 = por %p125, %p126
      %p129 = scmp.ne.s32.totalorder %s112, %s128
      %p130 = scmp.eq.s32.totalorder %s22, 0
      %p131 = por %p129, %p130
      %s132 = ssub.s32 %s24, %s31
      %s133 = ssub.s32 %s23, %s35
      %s134 = sor.u32 %s132, %s133
      %p135 = scmp.eq.s32.totalorder %s134, 0
      %s137 = sadd.s32 %s136, 1
      %s138 = scalar_select %p135, %s136, %s137
      %p141 = pneg %p135
      %p142 = scmp.eq.s32.totalorder %s16, 1
      %p143 = por %p141, %p142
      %p144 = scmp.ne.s32.totalorder %s136, %s139
      %p145 = scmp.eq.s32.totalorder %s16, 0
      %p146 = por %p144, %p145
      %p147 = scmp.ne.s32.totalorder %s136, %s139
      %p148 = scmp.eq.s32.totalorder %s21, 1
      %p149 = por %p147, %p148
      %p150 = scmp.ne.s32.totalorder %s139, %s140
      %p151 = scmp.eq.s32.totalorder %s21, 0
      %p152 = por %p150, %p151
      %p153 = scmp.ne.s32.totalorder %s139, %s140
      %p154 = scmp.eq.s32.totalorder %s22, 1
      %p155 = por %p153, %p154
      %p157 = scmp.ne.s32.totalorder %s140, %s156
      %p158 = scmp.eq.s32.totalorder %s22, 0
      %p159 = por %p157, %p158
      %p160 = scmp.le.s32.totalorder 1, %s16
      %p161 = scmp.lt.s32.totalorder %s16, 3
      %p162 = pnand %p160, %p161
      %p163 = pneg %p162
      // Predicated region
      $region9: #{tpu_custom_call.1} parent=5 // pred_check
        _
      $region10: #{tpu_custom_call.1} parent=5 // pred_check_branch
        %165 = sbr.rel (%p162) target = $region12
      $region11: #{tpu_custom_call.1} parent=5 // pred_region
        %s166 = ssub.s32 %s16, 1
        // Predicated region
        $region13: #{tpu_custom_call.1} parent=11 // pred_check
          %p167 = pneg %p54
        $region14: #{tpu_custom_call.1} parent=11 // pred_check_branch
          %169 = sbr.rel (%p167) target = $region16
        $region15: #{tpu_custom_call.1} parent=11 // pred_region
          %s170 = smul.u32 16, %s25
          %p171 = scmp.lt.s32.totalorder %s170, 15
          %s172 = scalar_select %p171, %s170, 15
          %s173 = smul.addr %s172, 2
          %s174 = smul.addr %s173, 8
          %s175 = scalar_lea.vmem %s0, %s174
          %s176 = smul.u32 16, %s25
        $region16: #{tpu_custom_call.1} parent=11 // pred_fallthru
          _
        // Predicated region
        $region17: #{tpu_custom_call.1} parent=11 // pred_check
          %p177 = pneg %p75
        $region18: #{tpu_custom_call.1} parent=11 // pred_check_branch
          %179 = sbr.rel (%p177) target = $region20
        $region19: #{tpu_custom_call.1} parent=11 // pred_region
          _
        $region20: #{tpu_custom_call.1} parent=11 // pred_fallthru
          _
        // Predicated region
        $region21: #{tpu_custom_call.1} parent=11 // pred_check
          %p180 = pneg %p96
        $region22: #{tpu_custom_call.1} parent=11 // pred_check_branch
          %182 = sbr.rel (%p180) target = $region24
        $region23: #{tpu_custom_call.1} parent=11 // pred_region
          _
        $region24: #{tpu_custom_call.1} parent=11 // pred_fallthru
          _
      $region12: #{tpu_custom_call.1} parent=5 // pred_fallthru
        _
      %p183 = scmp.lt.s32.totalorder %s16, 2
      // Predicated region
      $region25: #{tpu_custom_call.1} parent=5 // pred_check
        %p184 = pneg %p183
      $region26: #{tpu_custom_call.1} parent=5 // pred_check_branch
        %186 = sbr.rel (%p184) target = $region28
      $region27: #{tpu_custom_call.1} parent=5 // pred_region
        // Predicated region
        $region29: #{tpu_custom_call.1} parent=27 // pred_check
          %p187 = pneg %p118
        $region30: #{tpu_custom_call.1} parent=27 // pred_check_branch
          %189 = sbr.rel (%p187) target = $region32
        $region31: #{tpu_custom_call.1} parent=27 // pred_region
          %s190 = sand.u32 %s108, 1
          %s191 = scalar_lea.sflag [#allocation3], %s190
          %s192 = sand.u32 %s108, 1
          %s193 = smul.addr %s192, 256
          %s194 = scalar_lea.vmem [#allocation2], %s193
          %s195 = smul.u32 16, %s23
          %s197 = ssub.s32 4096, 4096
          %198 = vsyncadd %s191, %s197
          %s199 = smul.addr %s195, 2
          %s200 = smul.addr %s24, 32
          %s201 = sadd.s32 %s199, %s200
          %s202 = smul.addr %s201, 128
          %s203 = scalar_lea.hbm %s3, %s202
          %s204 = sshll.u32 %s194, 4
          %s205 = int_to_ptr.vmem [resolvable:$true] %s204
          %210 = dma.hbm_to_vmem [thread:$0]  %s203, 4096, %s205, %s191, 128, 128, 8
        $region32: #{tpu_custom_call.1} parent=27 // pred_fallthru
          _
      $region28: #{tpu_custom_call.1} parent=5 // pred_fallthru
        _
      %p211 = scmp.le.s32.totalorder 1, %s16
      %p212 = scmp.lt.s32.totalorder %s16, 3
      %p213 = pnand %p211, %p212
      %p214 = pneg %p213
      // Predicated region
      $region33: #{tpu_custom_call.1} parent=5 // pred_check
        _
      $region34: #{tpu_custom_call.1} parent=5 // pred_check_branch
        %216 = sbr.rel (%p213) target = $region36
      $region35: #{tpu_custom_call.1} parent=5 // pred_region
        %s217 = ssub.s32 %s16, 1
        %s218 = sand.u32 %s111, 1
        %s219 = scalar_lea.sflag [#allocation3], %s218
        %s220 = sand.u32 %s111, 1
        %s221 = smul.addr %s220, 256
        %s222 = scalar_lea.vmem [#allocation2], %s221
        // Predicated region
        $region37: #{tpu_custom_call.1} parent=35 // pred_check
          %p223 = pneg %p124
        $region38: #{tpu_custom_call.1} parent=35 // pred_check_branch
          %225 = sbr.rel (%p223) target = $region40
        $region39: #{tpu_custom_call.1} parent=35 // pred_region
          %226 = dma.done %s219, 4096
        $region40: #{tpu_custom_call.1} parent=35 // pred_fallthru
          _
        %s227 = smul.u32 16, %s25
        %p228 = scmp.lt.s32.totalorder %s227, 15
        %s229 = scalar_select %p228, %s227, 15
        %s230 = smul.addr %s229, 2
        %s231 = smul.addr %s230, 8
        %s232 = scalar_lea.vmem %s0, %s231
        %p233 = pneg %p54
        %p234 = pneg %p51
        %p235 = pneg %p75
        %p236 = pneg %p72
        %p237 = pneg %p96
        %p238 = pneg %p93
        %s239 = sand.u32 %s111, 1
        %s240 = scalar_lea.sflag [#allocation3], %s239
        %s241 = sand.u32 %s111, 1
        %s242 = smul.addr %s241, 256
        %s243 = scalar_lea.vmem [#allocation2], %s242
        %p244 = pneg %p124
        %p245 = pneg %p121
        %p246 = pneg %p152
        %p247 = pneg %p149
        %s248 = sand.u32 %s139, 1
        %s249 = scalar_lea.sflag [#allocation4], %s248
        %s250 = sand.u32 %s139, 1
        %s251 = smul.addr %s250, 256
        %s252 = scalar_lea.vmem [#allocation5], %s251
        %s253 = smul.u32 16, %s25
        %p254 = scmp.lt.s32.totalorder %s253, 15
        %s255 = scalar_select %p254, %s253, 15
        %s256 = smul.addr %s255, 2
        %s257 = smul.addr %s256, 8
        %s258 = scalar_lea.vmem %s0, %s257
        %s259 = smul.u32 16, %s25
        %s260 = smul.u32 16, %s25
        %s261 = smul.u32 16, %s25
        %v262 = vld [vmem:[%s258] sm:$0xff]
        %v263 = vld [vmem:[%s258 + $0x8] sm:$0xff]
        %v264 = vld [vmem:[%s258 + $0x10] sm:$0xff]
        %v265 = vld [vmem:[%s258 + $0x18] sm:$0xff]
        %v266 = vld [vmem:[%s258 + $0x20] sm:$0xff]
        %v267 = vld [vmem:[%s258 + $0x28] sm:$0xff]
        %v268 = vld [vmem:[%s258 + $0x30] sm:$0xff]
        %v269 = vld [vmem:[%s258 + $0x38] sm:$0xff]
        %v270 = vld [vmem:[%s258 + $0x40] sm:$0xff]
        %v271 = vld [vmem:[%s258 + $0x48] sm:$0xff]
        %v272 = vld [vmem:[%s258 + $0x50] sm:$0xff]
        %v273 = vld [vmem:[%s258 + $0x58] sm:$0xff]
        %v274 = vld [vmem:[%s258 + $0x60] sm:$0xff]
        %v275 = vld [vmem:[%s258 + $0x68] sm:$0xff]
        %v276 = vld [vmem:[%s258 + $0x70] sm:$0xff]
        %v277 = vld [vmem:[%s258 + $0x78] sm:$0xff]
        %v278 = vld [vmem:[%s258 + $0x80] sm:$0xff]
        %v279 = vld [vmem:[%s258 + $0x88] sm:$0xff]
        %v280 = vld [vmem:[%s258 + $0x90] sm:$0xff]
        %v281 = vld [vmem:[%s258 + $0x98] sm:$0xff]
        %v282 = vld [vmem:[%s258 + $0xa0] sm:$0xff]
        %v283 = vld [vmem:[%s258 + $0xa8] sm:$0xff]
        %v284 = vld [vmem:[%s258 + $0xb0] sm:$0xff]
        %v285 = vld [vmem:[%s258 + $0xb8] sm:$0xff]
        %v286 = vld [vmem:[%s258 + $0xc0] sm:$0xff]
        %v287 = vld [vmem:[%s258 + $0xc8] sm:$0xff]
        %v288 = vld [vmem:[%s258 + $0xd0] sm:$0xff]
        %v289 = vld [vmem:[%s258 + $0xd8] sm:$0xff]
        %v290 = vld [vmem:[%s258 + $0xe0] sm:$0xff]
        %v291 = vld [vmem:[%s258 + $0xe8] sm:$0xff]
        %v292 = vld [vmem:[%s258 + $0xf0] sm:$0xff]
        %v293 = vld [vmem:[%s258 + $0xf8] sm:$0xff]
        %v294 = vld [vmem:[%s1] sm:$0xf]
        %v295 = vld [vmem:[%s222] sm:$0xff]
        %v296 = vld [vmem:[%s222 + $0x8] sm:$0xff]
        %v297 = vld [vmem:[%s222 + $0x10] sm:$0xff]
        %v298 = vld [vmem:[%s222 + $0x18] sm:$0xff]
        %v299 = vld [vmem:[%s222 + $0x20] sm:$0xff]
        %v300 = vld [vmem:[%s222 + $0x28] sm:$0xff]
        %v301 = vld [vmem:[%s222 + $0x30] sm:$0xff]
        %v302 = vld [vmem:[%s222 + $0x38] sm:$0xff]
        %v303 = vld [vmem:[%s222 + $0x40] sm:$0xff]
        %v304 = vld [vmem:[%s222 + $0x48] sm:$0xff]
        %v305 = vld [vmem:[%s222 + $0x50] sm:$0xff]
        %v306 = vld [vmem:[%s222 + $0x58] sm:$0xff]
        %v307 = vld [vmem:[%s222 + $0x60] sm:$0xff]
        %v308 = vld [vmem:[%s222 + $0x68] sm:$0xff]
        %v309 = vld [vmem:[%s222 + $0x70] sm:$0xff]
        %v310 = vld [vmem:[%s222 + $0x78] sm:$0xff]
        %v311 = vld [vmem:[%s222 + $0x80] sm:$0xff]
        %v312 = vld [vmem:[%s222 + $0x88] sm:$0xff]
        %v313 = vld [vmem:[%s222 + $0x90] sm:$0xff]
        %v314 = vld [vmem:[%s222 + $0x98] sm:$0xff]
        %v315 = vld [vmem:[%s222 + $0xa0] sm:$0xff]
        %v316 = vld [vmem:[%s222 + $0xa8] sm:$0xff]
        %v317 = vld [vmem:[%s222 + $0xb0] sm:$0xff]
        %v318 = vld [vmem:[%s222 + $0xb8] sm:$0xff]
        %v319 = vld [vmem:[%s222 + $0xc0] sm:$0xff]
        %v320 = vld [vmem:[%s222 + $0xc8] sm:$0xff]
        %v321 = vld [vmem:[%s222 + $0xd0] sm:$0xff]
        %v322 = vld [vmem:[%s222 + $0xd8] sm:$0xff]
        %v323 = vld [vmem:[%s222 + $0xe0] sm:$0xff]
        %v324 = vld [vmem:[%s222 + $0xe8] sm:$0xff]
        %v325 = vld [vmem:[%s222 + $0xf0] sm:$0xff]
        %v326 = vld [vmem:[%s222 + $0xf8] sm:$0xff]
        %v327 = vld [vmem:[%s2] sm:$0x1]
        %v329 = vlaneseq
        %v330 = vshrl.u32 %v329, 7
        %v331 = vsub.s32 0, %v330
        %v332 = vrot.slane %v327, %v331
        %v334 = vadd.f32 %v295, %v332
        %v335 = vadd.f32 %v296, %v332
        %v336 = vadd.f32 %v297, %v332
        %v337 = vadd.f32 %v298, %v332
        %v338 = vadd.f32 %v299, %v332
        %v339 = vadd.f32 %v300, %v332
        %v340 = vadd.f32 %v301, %v332
        %v341 = vadd.f32 %v302, %v332
        %v342 = vadd.f32 %v303, %v332
        %v343 = vadd.f32 %v304, %v332
        %v344 = vadd.f32 %v305, %v332
        %v345 = vadd.f32 %v306, %v332
        %v346 = vadd.f32 %v307, %v332
        %v347 = vadd.f32 %v308, %v332
        %v348 = vadd.f32 %v309, %v332
        %v349 = vadd.f32 %v310, %v332
        %v350 = vadd.f32 %v311, %v332
        %v351 = vadd.f32 %v312, %v332
        %v352 = vadd.f32 %v313, %v332
        %v353 = vadd.f32 %v314, %v332
        %v354 = vadd.f32 %v315, %v332
        %v355 = vadd.f32 %v316, %v332
        %v356 = vadd.f32 %v317, %v332
        %v357 = vadd.f32 %v318, %v332
        %v358 = vadd.f32 %v319, %v332
        %v359 = vadd.f32 %v320, %v332
        %v360 = vadd.f32 %v321, %v332
        %v361 = vadd.f32 %v322, %v332
        %v362 = vadd.f32 %v323, %v332
        %v363 = vadd.f32 %v324, %v332
        %v364 = vadd.f32 %v325, %v332
        %v365 = vadd.f32 %v326, %v332
        %367 = vset.pattern.permute.xlu0 0
        %368 = vperm.xlu0 %367, %v262
        %v369 = vpop.permute.xlu0 %368
        %372 = vset.pattern.permute.xlu0 0
        %373 = vperm.xlu0 %372, %v263
        %v374 = vpop.permute.xlu0 %373
        %377 = vset.pattern.permute.xlu0 0
        %378 = vperm.xlu0 %377, %v264
        %v379 = vpop.permute.xlu0 %378
        %382 = vset.pattern.permute.xlu0 0
        %383 = vperm.xlu0 %382, %v265
        %v384 = vpop.permute.xlu0 %383
        %387 = vset.pattern.permute.xlu0 0
        %388 = vperm.xlu0 %387, %v266
        %v389 = vpop.permute.xlu0 %388
        %392 = vset.pattern.permute.xlu0 0
        %393 = vperm.xlu0 %392, %v267
        %v394 = vpop.permute.xlu0 %393
        %397 = vset.pattern.permute.xlu0 0
        %398 = vperm.xlu0 %397, %v268
        %v399 = vpop.permute.xlu0 %398
        %402 = vset.pattern.permute.xlu0 0
        %403 = vperm.xlu0 %402, %v269
        %v404 = vpop.permute.xlu0 %403
        %407 = vset.pattern.permute.xlu0 0
        %408 = vperm.xlu0 %407, %v270
        %v409 = vpop.permute.xlu0 %408
        %412 = vset.pattern.permute.xlu0 0
        %413 = vperm.xlu0 %412, %v271
        %v414 = vpop.permute.xlu0 %413
        %417 = vset.pattern.permute.xlu0 0
        %418 = vperm.xlu0 %417, %v272
        %v419 = vpop.permute.xlu0 %418
        %422 = vset.pattern.permute.xlu0 0
        %423 = vperm.xlu0 %422, %v273
        %v424 = vpop.permute.xlu0 %423
        %427 = vset.pattern.permute.xlu0 0
        %428 = vperm.xlu0 %427, %v274
        %v429 = vpop.permute.xlu0 %428
        %432 = vset.pattern.permute.xlu0 0
        %433 = vperm.xlu0 %432, %v275
        %v434 = vpop.permute.xlu0 %433
        %437 = vset.pattern.permute.xlu0 0
        %438 = vperm.xlu0 %437, %v276
        %v439 = vpop.permute.xlu0 %438
        %442 = vset.pattern.permute.xlu0 0
        %443 = vperm.xlu0 %442, %v277
        %v444 = vpop.permute.xlu0 %443
        %447 = vset.pattern.permute.xlu0 0
        %448 = vperm.xlu0 %447, %v278
        %v449 = vpop.permute.xlu0 %448
        %452 = vset.pattern.permute.xlu0 0
        %453 = vperm.xlu0 %452, %v279
        %v454 = vpop.permute.xlu0 %453
        %457 = vset.pattern.permute.xlu0 0
        %458 = vperm.xlu0 %457, %v280
        %v459 = vpop.permute.xlu0 %458
        %462 = vset.pattern.permute.xlu0 0
        %463 = vperm.xlu0 %462, %v281
        %v464 = vpop.permute.xlu0 %463
        %467 = vset.pattern.permute.xlu0 0
        %468 = vperm.xlu0 %467, %v282
        %v469 = vpop.permute.xlu0 %468
        %472 = vset.pattern.permute.xlu0 0
        %473 = vperm.xlu0 %472, %v283
        %v474 = vpop.permute.xlu0 %473
        %477 = vset.pattern.permute.xlu0 0
        %478 = vperm.xlu0 %477, %v284
        %v479 = vpop.permute.xlu0 %478
        %482 = vset.pattern.permute.xlu0 0
        %483 = vperm.xlu0 %482, %v285
        %v484 = vpop.permute.xlu0 %483
        %487 = vset.pattern.permute.xlu0 0
        %488 = vperm.xlu0 %487, %v286
        %v489 = vpop.permute.xlu0 %488
        %492 = vset.pattern.permute.xlu0 0
        %493 = vperm.xlu0 %492, %v287
        %v494 = vpop.permute.xlu0 %493
        %497 = vset.pattern.permute.xlu0 0
        %498 = vperm.xlu0 %497, %v288
        %v499 = vpop.permute.xlu0 %498
        %502 = vset.pattern.permute.xlu0 0
        %503 = vperm.xlu0 %502, %v289
        %v504 = vpop.permute.xlu0 %503
        %507 = vset.pattern.permute.xlu0 0
        %508 = vperm.xlu0 %507, %v290
        %v509 = vpop.permute.xlu0 %508
        %512 = vset.pattern.permute.xlu0 0
        %513 = vperm.xlu0 %512, %v291
        %v514 = vpop.permute.xlu0 %513
        %517 = vset.pattern.permute.xlu0 0
        %518 = vperm.xlu0 %517, %v292
        %v519 = vpop.permute.xlu0 %518
        %522 = vset.pattern.permute.xlu0 0
        %523 = vperm.xlu0 %522, %v293
        %v524 = vpop.permute.xlu0 %523
        %v526 = vlaneseq
        %v527 = vshrl.u32 %v526, 7
        %v528 = vsub.s32 0, %v527
        %v529 = vrot.slane %v294, %v528
        %v530 = vmul.f32 %v369, %v529
        %v531 = vmul.f32 %v374, %v529
        %v532 = vmul.f32 %v379, %v529
        %v533 = vmul.f32 %v384, %v529
        %v534 = vmul.f32 %v389, %v529
        %v535 = vmul.f32 %v394, %v529
        %v536 = vmul.f32 %v399, %v529
        %v537 = vmul.f32 %v404, %v529
        %v538 = vmul.f32 %v409, %v529
        %v539 = vmul.f32 %v414, %v529
        %v540 = vmul.f32 %v419, %v529
        %v541 = vmul.f32 %v424, %v529
        %v542 = vmul.f32 %v429, %v529
        %v543 = vmul.f32 %v434, %v529
        %v544 = vmul.f32 %v439, %v529
        %v545 = vmul.f32 %v444, %v529
        %v546 = vmul.f32 %v449, %v529
        %v547 = vmul.f32 %v454, %v529
        %v548 = vmul.f32 %v459, %v529
        %v549 = vmul.f32 %v464, %v529
        %v550 = vmul.f32 %v469, %v529
        %v551 = vmul.f32 %v474, %v529
        %v552 = vmul.f32 %v479, %v529
        %v553 = vmul.f32 %v484, %v529
        %v554 = vmul.f32 %v489, %v529
        %v555 = vmul.f32 %v494, %v529
        %v556 = vmul.f32 %v499, %v529
        %v557 = vmul.f32 %v504, %v529
        %v558 = vmul.f32 %v509, %v529
        %v559 = vmul.f32 %v514, %v529
        %v560 = vmul.f32 %v519, %v529
        %v561 = vmul.f32 %v524, %v529
        %v562 = vadd.f32 %v334, %v530
        %v563 = vadd.f32 %v335, %v531
        %v564 = vadd.f32 %v336, %v532
        %v565 = vadd.f32 %v337, %v533
        %v566 = vadd.f32 %v338, %v534
        %v567 = vadd.f32 %v339, %v535
        %v568 = vadd.f32 %v340, %v536
        %v569 = vadd.f32 %v341, %v537
        %v570 = vadd.f32 %v342, %v538
        %v571 = vadd.f32 %v343, %v539
        %v572 = vadd.f32 %v344, %v540
        %v573 = vadd.f32 %v345, %v541
        %v574 = vadd.f32 %v346, %v542
        %v575 = vadd.f32 %v347, %v543
        %v576 = vadd.f32 %v348, %v544
        %v577 = vadd.f32 %v349, %v545
        %v578 = vadd.f32 %v350, %v546
        %v579 = vadd.f32 %v351, %v547
        %v580 = vadd.f32 %v352, %v548
        %v581 = vadd.f32 %v353, %v549
        %v582 = vadd.f32 %v354, %v550
        %v583 = vadd.f32 %v355, %v551
        %v584 = vadd.f32 %v356, %v552
        %v585 = vadd.f32 %v357, %v553
        %v586 = vadd.f32 %v358, %v554
        %v587 = vadd.f32 %v359, %v555
        %v588 = vadd.f32 %v360, %v556
        %v589 = vadd.f32 %v361, %v557
        %v590 = vadd.f32 %v362, %v558
        %v591 = vadd.f32 %v363, %v559
        %v592 = vadd.f32 %v364, %v560
        %v593 = vadd.f32 %v365, %v561
        %594 = vset.pattern.permute.xlu0 1
        %595 = vperm.xlu0 %594, %v262
        %v596 = vpop.permute.xlu0 %595
        %598 = vset.pattern.permute.xlu0 1
        %599 = vperm.xlu0 %598, %v263
        %v600 = vpop.permute.xlu0 %599
        %602 = vset.pattern.permute.xlu0 1
        %603 = vperm.xlu0 %602, %v264
        %v604 = vpop.permute.xlu0 %603
        %606 = vset.pattern.permute.xlu0 1
        %607 = vperm.xlu0 %606, %v265
        %v608 = vpop.permute.xlu0 %607
        %610 = vset.pattern.permute.xlu0 1
        %611 = vperm.xlu0 %610, %v266
        %v612 = vpop.permute.xlu0 %611
        %614 = vset.pattern.permute.xlu0 1
        %615 = vperm.xlu0 %614, %v267
        %v616 = vpop.permute.xlu0 %615
        %618 = vset.pattern.permute.xlu0 1
        %619 = vperm.xlu0 %618, %v268
        %v620 = vpop.permute.xlu0 %619
        %622 = vset.pattern.permute.xlu0 1
        %623 = vperm.xlu0 %622, %v269
        %v624 = vpop.permute.xlu0 %623
        %626 = vset.pattern.permute.xlu0 1
        %627 = vperm.xlu0 %626, %v270
        %v628 = vpop.permute.xlu0 %627
        %630 = vset.pattern.permute.xlu0 1
        %631 = vperm.xlu0 %630, %v271
        %v632 = vpop.permute.xlu0 %631
        %634 = vset.pattern.permute.xlu0 1
        %635 = vperm.xlu0 %634, %v272
        %v636 = vpop.permute.xlu0 %635
        %638 = vset.pattern.permute.xlu0 1
        %639 = vperm.xlu0 %638, %v273
        %v640 = vpop.permute.xlu0 %639
        %642 = vset.pattern.permute.xlu0 1
        %643 = vperm.xlu0 %642, %v274
        %v644 = vpop.permute.xlu0 %643
        %646 = vset.pattern.permute.xlu0 1
        %647 = vperm.xlu0 %646, %v275
        %v648 = vpop.permute.xlu0 %647
        %650 = vset.pattern.permute.xlu0 1
        %651 = vperm.xlu0 %650, %v276
        %v652 = vpop.permute.xlu0 %651
        %654 = vset.pattern.permute.xlu0 1
        %655 = vperm.xlu0 %654, %v277
        %v656 = vpop.permute.xlu0 %655
        %658 = vset.pattern.permute.xlu0 1
        %659 = vperm.xlu0 %658, %v278
        %v660 = vpop.permute.xlu0 %659
        %662 = vset.pattern.permute.xlu0 1
        %663 = vperm.xlu0 %662, %v279
        %v664 = vpop.permute.xlu0 %663
        %666 = vset.pattern.permute.xlu0 1
        %667 = vperm.xlu0 %666, %v280
        %v668 = vpop.permute.xlu0 %667
        %670 = vset.pattern.permute.xlu0 1
        %671 = vperm.xlu0 %670, %v281
        %v672 = vpop.permute.xlu0 %671
        %674 = vset.pattern.permute.xlu0 1
        %675 = vperm.xlu0 %674, %v282
        %v676 = vpop.permute.xlu0 %675
        %678 = vset.pattern.permute.xlu0 1
        %679 = vperm.xlu0 %678, %v283
        %v680 = vpop.permute.xlu0 %679
        %682 = vset.pattern.permute.xlu0 1
        %683 = vperm.xlu0 %682, %v284
        %v684 = vpop.permute.xlu0 %683
        %686 = vset.pattern.permute.xlu0 1
        %687 = vperm.xlu0 %686, %v285
        %v688 = vpop.permute.xlu0 %687
        %690 = vset.pattern.permute.xlu0 1
        %691 = vperm.xlu0 %690, %v286
        %v692 = vpop.permute.xlu0 %691
        %694 = vset.pattern.permute.xlu0 1
        %695 = vperm.xlu0 %694, %v287
        %v696 = vpop.permute.xlu0 %695
        %698 = vset.pattern.permute.xlu0 1
        %699 = vperm.xlu0 %698, %v288
        %v700 = vpop.permute.xlu0 %699
        %702 = vset.pattern.permute.xlu0 1
        %703 = vperm.xlu0 %702, %v289
        %v704 = vpop.permute.xlu0 %703
        %706 = vset.pattern.permute.xlu0 1
        %707 = vperm.xlu0 %706, %v290
        %v708 = vpop.permute.xlu0 %707
        %710 = vset.pattern.permute.xlu0 1
        %711 = vperm.xlu0 %710, %v291
        %v712 = vpop.permute.xlu0 %711
        %714 = vset.pattern.permute.xlu0 1
        %715 = vperm.xlu0 %714, %v292
        %v716 = vpop.permute.xlu0 %715
        %718 = vset.pattern.permute.xlu0 1
        %719 = vperm.xlu0 %718, %v293
        %v720 = vpop.permute.xlu0 %719
        %v722 = vlaneseq
        %v723 = vshrl.u32 %v722, 7
        %v724 = vsub.s32 1, %v723
        %v725 = vrot.slane %v294, %v724
        %v726 = vmul.f32 %v596, %v725
        %v727 = vmul.f32 %v600, %v725
        %v728 = vmul.f32 %v604, %v725
        %v729 = vmul.f32 %v608, %v725
        %v730 = vmul.f32 %v612, %v725
        %v731 = vmul.f32 %v616, %v725
        %v732 = vmul.f32 %v620, %v725
        %v733 = vmul.f32 %v624, %v725
        %v734 = vmul.f32 %v628, %v725
        %v735 = vmul.f32 %v632, %v725
        %v736 = vmul.f32 %v636, %v725
        %v737 = vmul.f32 %v640, %v725
        %v738 = vmul.f32 %v644, %v725
        %v739 = vmul.f32 %v648, %v725
        %v740 = vmul.f32 %v652, %v725
        %v741 = vmul.f32 %v656, %v725
        %v742 = vmul.f32 %v660, %v725
        %v743 = vmul.f32 %v664, %v725
        %v744 = vmul.f32 %v668, %v725
        %v745 = vmul.f32 %v672, %v725
        %v746 = vmul.f32 %v676, %v725
        %v747 = vmul.f32 %v680, %v725
        %v748 = vmul.f32 %v684, %v725
        %v749 = vmul.f32 %v688, %v725
        %v750 = vmul.f32 %v692, %v725
        %v751 = vmul.f32 %v696, %v725
        %v752 = vmul.f32 %v700, %v725
        %v753 = vmul.f32 %v704, %v725
        %v754 = vmul.f32 %v708, %v725
        %v755 = vmul.f32 %v712, %v725
        %v756 = vmul.f32 %v716, %v725
        %v757 = vmul.f32 %v720, %v725
        %v758 = vadd.f32 %v562, %v726
        %v759 = vadd.f32 %v563, %v727
        %v760 = vadd.f32 %v564, %v728
        %v761 = vadd.f32 %v565, %v729
        %v762 = vadd.f32 %v566, %v730
        %v763 = vadd.f32 %v567, %v731
        %v764 = vadd.f32 %v568, %v732
        %v765 = vadd.f32 %v569, %v733
        %v766 = vadd.f32 %v570, %v734
        %v767 = vadd.f32 %v571, %v735
        %v768 = vadd.f32 %v572, %v736
        %v769 = vadd.f32 %v573, %v737
        %v770 = vadd.f32 %v574, %v738
        %v771 = vadd.f32 %v575, %v739
        %v772 = vadd.f32 %v576, %v740
        %v773 = vadd.f32 %v577, %v741
        %v774 = vadd.f32 %v578, %v742
        %v775 = vadd.f32 %v579, %v743
        %v776 = vadd.f32 %v580, %v744
        %v777 = vadd.f32 %v581, %v745
        %v778 = vadd.f32 %v582, %v746
        %v779 = vadd.f32 %v583, %v747
        %v780 = vadd.f32 %v584, %v748
        %v781 = vadd.f32 %v585, %v749
        %v782 = vadd.f32 %v586, %v750
        %v783 = vadd.f32 %v587, %v751
        %v784 = vadd.f32 %v588, %v752
        %v785 = vadd.f32 %v589, %v753
        %v786 = vadd.f32 %v590, %v754
        %v787 = vadd.f32 %v591, %v755
        %v788 = vadd.f32 %v592, %v756
        %v789 = vadd.f32 %v593, %v757
        %790 = vset.pattern.permute.xlu0 2
        %791 = vperm.xlu0 %790, %v262
        %v792 = vpop.permute.xlu0 %791
        %794 = vset.pattern.permute.xlu0 2
        %795 = vperm.xlu0 %794, %v263
        %v796 = vpop.permute.xlu0 %795
        %798 = vset.pattern.permute.xlu0 2
        %799 = vperm.xlu0 %798, %v264
        %v800 = vpop.permute.xlu0 %799
        %802 = vset.pattern.permute.xlu0 2
        %803 = vperm.xlu0 %802, %v265
        %v804 = vpop.permute.xlu0 %803
        %806 = vset.pattern.permute.xlu0 2
        %807 = vperm.xlu0 %806, %v266
        %v808 = vpop.permute.xlu0 %807
        %810 = vset.pattern.permute.xlu0 2
        %811 = vperm.xlu0 %810, %v267
        %v812 = vpop.permute.xlu0 %811
        %814 = vset.pattern.permute.xlu0 2
        %815 = vperm.xlu0 %814, %v268
        %v816 = vpop.permute.xlu0 %815
        %818 = vset.pattern.permute.xlu0 2
        %819 = vperm.xlu0 %818, %v269
        %v820 = vpop.permute.xlu0 %819
        %822 = vset.pattern.permute.xlu0 2
        %823 = vperm.xlu0 %822, %v270
        %v824 = vpop.permute.xlu0 %823
        %826 = vset.pattern.permute.xlu0 2
        %827 = vperm.xlu0 %826, %v271
        %v828 = vpop.permute.xlu0 %827
        %830 = vset.pattern.permute.xlu0 2
        %831 = vperm.xlu0 %830, %v272
        %v832 = vpop.permute.xlu0 %831
        %834 = vset.pattern.permute.xlu0 2
        %835 = vperm.xlu0 %834, %v273
        %v836 = vpop.permute.xlu0 %835
        %838 = vset.pattern.permute.xlu0 2
        %839 = vperm.xlu0 %838, %v274
        %v840 = vpop.permute.xlu0 %839
        %842 = vset.pattern.permute.xlu0 2
        %843 = vperm.xlu0 %842, %v275
        %v844 = vpop.permute.xlu0 %843
        %846 = vset.pattern.permute.xlu0 2
        %847 = vperm.xlu0 %846, %v276
        %v848 = vpop.permute.xlu0 %847
        %850 = vset.pattern.permute.xlu0 2
        %851 = vperm.xlu0 %850, %v277
        %v852 = vpop.permute.xlu0 %851
        %854 = vset.pattern.permute.xlu0 2
        %855 = vperm.xlu0 %854, %v278
        %v856 = vpop.permute.xlu0 %855
        %858 = vset.pattern.permute.xlu0 2
        %859 = vperm.xlu0 %858, %v279
        %v860 = vpop.permute.xlu0 %859
        %862 = vset.pattern.permute.xlu0 2
        %863 = vperm.xlu0 %862, %v280
        %v864 = vpop.permute.xlu0 %863
        %866 = vset.pattern.permute.xlu0 2
        %867 = vperm.xlu0 %866, %v281
        %v868 = vpop.permute.xlu0 %867
        %870 = vset.pattern.permute.xlu0 2
        %871 = vperm.xlu0 %870, %v282
        %v872 = vpop.permute.xlu0 %871
        %874 = vset.pattern.permute.xlu0 2
        %875 = vperm.xlu0 %874, %v283
        %v876 = vpop.permute.xlu0 %875
        %878 = vset.pattern.permute.xlu0 2
        %879 = vperm.xlu0 %878, %v284
        %v880 = vpop.permute.xlu0 %879
        %882 = vset.pattern.permute.xlu0 2
        %883 = vperm.xlu0 %882, %v285
        %v884 = vpop.permute.xlu0 %883
        %886 = vset.pattern.permute.xlu0 2
        %887 = vperm.xlu0 %886, %v286
        %v888 = vpop.permute.xlu0 %887
        %890 = vset.pattern.permute.xlu0 2
        %891 = vperm.xlu0 %890, %v287
        %v892 = vpop.permute.xlu0 %891
        %894 = vset.pattern.permute.xlu0 2
        %895 = vperm.xlu0 %894, %v288
        %v896 = vpop.permute.xlu0 %895
        %898 = vset.pattern.permute.xlu0 2
        %899 = vperm.xlu0 %898, %v289
        %v900 = vpop.permute.xlu0 %899
        %902 = vset.pattern.permute.xlu0 2
        %903 = vperm.xlu0 %902, %v290
        %v904 = vpop.permute.xlu0 %903
        %906 = vset.pattern.permute.xlu0 2
        %907 = vperm.xlu0 %906, %v291
        %v908 = vpop.permute.xlu0 %907
        %910 = vset.pattern.permute.xlu0 2
        %911 = vperm.xlu0 %910, %v292
        %v912 = vpop.permute.xlu0 %911
        %914 = vset.pattern.permute.xlu0 2
        %915 = vperm.xlu0 %914, %v293
        %v916 = vpop.permute.xlu0 %915
        %v918 = vlaneseq
        %v919 = vshrl.u32 %v918, 7
        %v920 = vsub.s32 2, %v919
        %v921 = vrot.slane %v294, %v920
        %v922 = vmul.f32 %v792, %v921
        %v923 = vmul.f32 %v796, %v921
        %v924 = vmul.f32 %v800, %v921
        %v925 = vmul.f32 %v804, %v921
        %v926 = vmul.f32 %v808, %v921
        %v927 = vmul.f32 %v812, %v921
        %v928 = vmul.f32 %v816, %v921
        %v929 = vmul.f32 %v820, %v921
        %v930 = vmul.f32 %v824, %v921
        %v931 = vmul.f32 %v828, %v921
        %v932 = vmul.f32 %v832, %v921
        %v933 = vmul.f32 %v836, %v921
        %v934 = vmul.f32 %v840, %v921
        %v935 = vmul.f32 %v844, %v921
        %v936 = vmul.f32 %v848, %v921
        %v937 = vmul.f32 %v852, %v921
        %v938 = vmul.f32 %v856, %v921
        %v939 = vmul.f32 %v860, %v921
        %v940 = vmul.f32 %v864, %v921
        %v941 = vmul.f32 %v868, %v921
        %v942 = vmul.f32 %v872, %v921
        %v943 = vmul.f32 %v876, %v921
        %v944 = vmul.f32 %v880, %v921
        %v945 = vmul.f32 %v884, %v921
        %v946 = vmul.f32 %v888, %v921
        %v947 = vmul.f32 %v892, %v921
        %v948 = vmul.f32 %v896, %v921
        %v949 = vmul.f32 %v900, %v921
        %v950 = vmul.f32 %v904, %v921
        %v951 = vmul.f32 %v908, %v921
        %v952 = vmul.f32 %v912, %v921
        %v953 = vmul.f32 %v916, %v921
        %v954 = vadd.f32 %v758, %v922
        %v955 = vadd.f32 %v759, %v923
        %v956 = vadd.f32 %v760, %v924
        %v957 = vadd.f32 %v761, %v925
        %v958 = vadd.f32 %v762, %v926
        %v959 = vadd.f32 %v763, %v927
        %v960 = vadd.f32 %v764, %v928
        %v961 = vadd.f32 %v765, %v929
        %v962 = vadd.f32 %v766, %v930
        %v963 = vadd.f32 %v767, %v931
        %v964 = vadd.f32 %v768, %v932
        %v965 = vadd.f32 %v769, %v933
        %v966 = vadd.f32 %v770, %v934
        %v967 = vadd.f32 %v771, %v935
        %v968 = vadd.f32 %v772, %v936
        %v969 = vadd.f32 %v773, %v937
        %v970 = vadd.f32 %v774, %v938
        %v971 = vadd.f32 %v775, %v939
        %v972 = vadd.f32 %v776, %v940
        %v973 = vadd.f32 %v777, %v941
        %v974 = vadd.f32 %v778, %v942
        %v975 = vadd.f32 %v779, %v943
        %v976 = vadd.f32 %v780, %v944
        %v977 = vadd.f32 %v781, %v945
        %v978 = vadd.f32 %v782, %v946
        %v979 = vadd.f32 %v783, %v947
        %v980 = vadd.f32 %v784, %v948
        %v981 = vadd.f32 %v785, %v949
        %v982 = vadd.f32 %v786, %v950
        %v983 = vadd.f32 %v787, %v951
        %v984 = vadd.f32 %v788, %v952
        %v985 = vadd.f32 %v789, %v953
        %986 = vset.pattern.permute.xlu0 3
        %987 = vperm.xlu0 %986, %v262
        %v988 = vpop.permute.xlu0 %987
        %990 = vset.pattern.permute.xlu0 3
        %991 = vperm.xlu0 %990, %v263
        %v992 = vpop.permute.xlu0 %991
        %994 = vset.pattern.permute.xlu0 3
        %995 = vperm.xlu0 %994, %v264
        %v996 = vpop.permute.xlu0 %995
        %998 = vset.pattern.permute.xlu0 3
        %999 = vperm.xlu0 %998, %v265
        %v1000 = vpop.permute.xlu0 %999
        %1002 = vset.pattern.permute.xlu0 3
        %1003 = vperm.xlu0 %1002, %v266
        %v1004 = vpop.permute.xlu0 %1003
        %1006 = vset.pattern.permute.xlu0 3
        %1007 = vperm.xlu0 %1006, %v267
        %v1008 = vpop.permute.xlu0 %1007
        %1010 = vset.pattern.permute.xlu0 3
        %1011 = vperm.xlu0 %1010, %v268
        %v1012 = vpop.permute.xlu0 %1011
        %1014 = vset.pattern.permute.xlu0 3
        %1015 = vperm.xlu0 %1014, %v269
        %v1016 = vpop.permute.xlu0 %1015
        %1018 = vset.pattern.permute.xlu0 3
        %1019 = vperm.xlu0 %1018, %v270
        %v1020 = vpop.permute.xlu0 %1019
        %1022 = vset.pattern.permute.xlu0 3
        %1023 = vperm.xlu0 %1022, %v271
        %v1024 = vpop.permute.xlu0 %1023
        %1026 = vset.pattern.permute.xlu0 3
        %1027 = vperm.xlu0 %1026, %v272
        %v1028 = vpop.permute.xlu0 %1027
        %1030 = vset.pattern.permute.xlu0 3
        %1031 = vperm.xlu0 %1030, %v273
        %v1032 = vpop.permute.xlu0 %1031
        %1034 = vset.pattern.permute.xlu0 3
        %1035 = vperm.xlu0 %1034, %v274
        %v1036 = vpop.permute.xlu0 %1035
        %1038 = vset.pattern.permute.xlu0 3
        %1039 = vperm.xlu0 %1038, %v275
        %v1040 = vpop.permute.xlu0 %1039
        %1042 = vset.pattern.permute.xlu0 3
        %1043 = vperm.xlu0 %1042, %v276
        %v1044 = vpop.permute.xlu0 %1043
        %1046 = vset.pattern.permute.xlu0 3
        %1047 = vperm.xlu0 %1046, %v277
        %v1048 = vpop.permute.xlu0 %1047
        %1050 = vset.pattern.permute.xlu0 3
        %1051 = vperm.xlu0 %1050, %v278
        %v1052 = vpop.permute.xlu0 %1051
        %1054 = vset.pattern.permute.xlu0 3
        %1055 = vperm.xlu0 %1054, %v279
        %v1056 = vpop.permute.xlu0 %1055
        %1058 = vset.pattern.permute.xlu0 3
        %1059 = vperm.xlu0 %1058, %v280
        %v1060 = vpop.permute.xlu0 %1059
        %1062 = vset.pattern.permute.xlu0 3
        %1063 = vperm.xlu0 %1062, %v281
        %v1064 = vpop.permute.xlu0 %1063
        %1066 = vset.pattern.permute.xlu0 3
        %1067 = vperm.xlu0 %1066, %v282
        %v1068 = vpop.permute.xlu0 %1067
        %1070 = vset.pattern.permute.xlu0 3
        %1071 = vperm.xlu0 %1070, %v283
        %v1072 = vpop.permute.xlu0 %1071
        %1074 = vset.pattern.permute.xlu0 3
        %1075 = vperm.xlu0 %1074, %v284
        %v1076 = vpop.permute.xlu0 %1075
        %1078 = vset.pattern.permute.xlu0 3
        %1079 = vperm.xlu0 %1078, %v285
        %v1080 = vpop.permute.xlu0 %1079
        %1082 = vset.pattern.permute.xlu0 3
        %1083 = vperm.xlu0 %1082, %v286
        %v1084 = vpop.permute.xlu0 %1083
        %1086 = vset.pattern.permute.xlu0 3
        %1087 = vperm.xlu0 %1086, %v287
        %v1088 = vpop.permute.xlu0 %1087
        %1090 = vset.pattern.permute.xlu0 3
        %1091 = vperm.xlu0 %1090, %v288
        %v1092 = vpop.permute.xlu0 %1091
        %1094 = vset.pattern.permute.xlu0 3
        %1095 = vperm.xlu0 %1094, %v289
        %v1096 = vpop.permute.xlu0 %1095
        %1098 = vset.pattern.permute.xlu0 3
        %1099 = vperm.xlu0 %1098, %v290
        %v1100 = vpop.permute.xlu0 %1099
        %1102 = vset.pattern.permute.xlu0 3
        %1103 = vperm.xlu0 %1102, %v291
        %v1104 = vpop.permute.xlu0 %1103
        %1106 = vset.pattern.permute.xlu0 3
        %1107 = vperm.xlu0 %1106, %v292
        %v1108 = vpop.permute.xlu0 %1107
        %1110 = vset.pattern.permute.xlu0 3
        %1111 = vperm.xlu0 %1110, %v293
        %v1112 = vpop.permute.xlu0 %1111
        %v1114 = vlaneseq
        %v1115 = vshrl.u32 %v1114, 7
        %v1116 = vsub.s32 3, %v1115
        %v1117 = vrot.slane %v294, %v1116
        %v1118 = vmul.f32 %v988, %v1117
        %v1119 = vmul.f32 %v992, %v1117
        %v1120 = vmul.f32 %v996, %v1117
        %v1121 = vmul.f32 %v1000, %v1117
        %v1122 = vmul.f32 %v1004, %v1117
        %v1123 = vmul.f32 %v1008, %v1117
        %v1124 = vmul.f32 %v1012, %v1117
        %v1125 = vmul.f32 %v1016, %v1117
        %v1126 = vmul.f32 %v1020, %v1117
        %v1127 = vmul.f32 %v1024, %v1117
        %v1128 = vmul.f32 %v1028, %v1117
        %v1129 = vmul.f32 %v1032, %v1117
        %v1130 = vmul.f32 %v1036, %v1117
        %v1131 = vmul.f32 %v1040, %v1117
        %v1132 = vmul.f32 %v1044, %v1117
        %v1133 = vmul.f32 %v1048, %v1117
        %v1134 = vmul.f32 %v1052, %v1117
        %v1135 = vmul.f32 %v1056, %v1117
        %v1136 = vmul.f32 %v1060, %v1117
        %v1137 = vmul.f32 %v1064, %v1117
        %v1138 = vmul.f32 %v1068, %v1117
        %v1139 = vmul.f32 %v1072, %v1117
        %v1140 = vmul.f32 %v1076, %v1117
        %v1141 = vmul.f32 %v1080, %v1117
        %v1142 = vmul.f32 %v1084, %v1117
        %v1143 = vmul.f32 %v1088, %v1117
        %v1144 = vmul.f32 %v1092, %v1117
        %v1145 = vmul.f32 %v1096, %v1117
        %v1146 = vmul.f32 %v1100, %v1117
        %v1147 = vmul.f32 %v1104, %v1117
        %v1148 = vmul.f32 %v1108, %v1117
        %v1149 = vmul.f32 %v1112, %v1117
        %v1150 = vadd.f32 %v954, %v1118
        %v1151 = vadd.f32 %v955, %v1119
        %v1152 = vadd.f32 %v956, %v1120
        %v1153 = vadd.f32 %v957, %v1121
        %v1154 = vadd.f32 %v958, %v1122
        %v1155 = vadd.f32 %v959, %v1123
        %v1156 = vadd.f32 %v960, %v1124
        %v1157 = vadd.f32 %v961, %v1125
        %v1158 = vadd.f32 %v962, %v1126
        %v1159 = vadd.f32 %v963, %v1127
        %v1160 = vadd.f32 %v964, %v1128
        %v1161 = vadd.f32 %v965, %v1129
        %v1162 = vadd.f32 %v966, %v1130
        %v1163 = vadd.f32 %v967, %v1131
        %v1164 = vadd.f32 %v968, %v1132
        %v1165 = vadd.f32 %v969, %v1133
        %v1166 = vadd.f32 %v970, %v1134
        %v1167 = vadd.f32 %v971, %v1135
        %v1168 = vadd.f32 %v972, %v1136
        %v1169 = vadd.f32 %v973, %v1137
        %v1170 = vadd.f32 %v974, %v1138
        %v1171 = vadd.f32 %v975, %v1139
        %v1172 = vadd.f32 %v976, %v1140
        %v1173 = vadd.f32 %v977, %v1141
        %v1174 = vadd.f32 %v978, %v1142
        %v1175 = vadd.f32 %v979, %v1143
        %v1176 = vadd.f32 %v980, %v1144
        %v1177 = vadd.f32 %v981, %v1145
        %v1178 = vadd.f32 %v982, %v1146
        %v1179 = vadd.f32 %v983, %v1147
        %v1180 = vadd.f32 %v984, %v1148
        %v1181 = vadd.f32 %v985, %v1149
        %vm1182 = vcmask 261120
        %1183 = vst.msk [vmem:[%s252] sm:$0xff] %vm1182, %v1150
        %1184 = vst.msk [vmem:[%s252 + $0x8] sm:$0xff] %vm1182, %v1151
        %1185 = vst.msk [vmem:[%s252 + $0x10] sm:$0xff] %vm1182, %v1152
        %1186 = vst.msk [vmem:[%s252 + $0x18] sm:$0xff] %vm1182, %v1153
        %1187 = vst.msk [vmem:[%s252 + $0x20] sm:$0xff] %vm1182, %v1154
        %1188 = vst.msk [vmem:[%s252 + $0x28] sm:$0xff] %vm1182, %v1155
        %1189 = vst.msk [vmem:[%s252 + $0x30] sm:$0xff] %vm1182, %v1156
        %1190 = vst.msk [vmem:[%s252 + $0x38] sm:$0xff] %vm1182, %v1157
        %1191 = vst.msk [vmem:[%s252 + $0x40] sm:$0xff] %vm1182, %v1158
        %1192 = vst.msk [vmem:[%s252 + $0x48] sm:$0xff] %vm1182, %v1159
        %1193 = vst.msk [vmem:[%s252 + $0x50] sm:$0xff] %vm1182, %v1160
        %1194 = vst.msk [vmem:[%s252 + $0x58] sm:$0xff] %vm1182, %v1161
        %1195 = vst.msk [vmem:[%s252 + $0x60] sm:$0xff] %vm1182, %v1162
        %1196 = vst.msk [vmem:[%s252 + $0x68] sm:$0xff] %vm1182, %v1163
        %1197 = vst.msk [vmem:[%s252 + $0x70] sm:$0xff] %vm1182, %v1164
        %1198 = vst.msk [vmem:[%s252 + $0x78] sm:$0xff] %vm1182, %v1165
        %1199 = vst.msk [vmem:[%s252 + $0x80] sm:$0xff] %vm1182, %v1166
        %1200 = vst.msk [vmem:[%s252 + $0x88] sm:$0xff] %vm1182, %v1167
        %1201 = vst.msk [vmem:[%s252 + $0x90] sm:$0xff] %vm1182, %v1168
        %1202 = vst.msk [vmem:[%s252 + $0x98] sm:$0xff] %vm1182, %v1169
        %1203 = vst.msk [vmem:[%s252 + $0xa0] sm:$0xff] %vm1182, %v1170
        %1204 = vst.msk [vmem:[%s252 + $0xa8] sm:$0xff] %vm1182, %v1171
        %1205 = vst.msk [vmem:[%s252 + $0xb0] sm:$0xff] %vm1182, %v1172
        %1206 = vst.msk [vmem:[%s252 + $0xb8] sm:$0xff] %vm1182, %v1173
        %1207 = vst.msk [vmem:[%s252 + $0xc0] sm:$0xff] %vm1182, %v1174
        %1208 = vst.msk [vmem:[%s252 + $0xc8] sm:$0xff] %vm1182, %v1175
        %1209 = vst.msk [vmem:[%s252 + $0xd0] sm:$0xff] %vm1182, %v1176
        %1210 = vst.msk [vmem:[%s252 + $0xd8] sm:$0xff] %vm1182, %v1177
        %1211 = vst.msk [vmem:[%s252 + $0xe0] sm:$0xff] %vm1182, %v1178
        %1212 = vst.msk [vmem:[%s252 + $0xe8] sm:$0xff] %vm1182, %v1179
        %1213 = vst.msk [vmem:[%s252 + $0xf0] sm:$0xff] %vm1182, %v1180
        %1214 = vst.msk [vmem:[%s252 + $0xf8] sm:$0xff] %vm1182, %v1181
        %s1215 = sand.u32 %s139, 1
        %s1216 = scalar_lea.sflag [#allocation4], %s1215
        %s1217 = sand.u32 %s139, 1
        %s1218 = smul.addr %s1217, 256
        %s1219 = scalar_lea.vmem [#allocation5], %s1218
        // Predicated region
        $region41: #{tpu_custom_call.1} parent=35 // pred_check
          %p1220 = pneg %p149
        $region42: #{tpu_custom_call.1} parent=35 // pred_check_branch
          %1222 = sbr.rel (%p1220) target = $region44
        $region43: #{tpu_custom_call.1} parent=35 // pred_region
          %s1223 = smul.u32 16, %s25
          %s1225 = ssub.s32 4096, 4096
          %1226 = vsyncadd %s1216, %s1225
          %s1227 = smul.addr %s1223, 2
          %s1228 = smul.addr %s26, 32
          %s1229 = sadd.s32 %s1227, %s1228
          %s1230 = smul.addr %s1229, 128
          %s1231 = scalar_lea.hbm %s4, %s1230
          %s1232 = sshll.u32 %s1219, 4
          %s1233 = int_to_ptr.vmem [resolvable:$true] %s1232
          %1238 = dma.vmem_to_hbm [thread:$0]  %s1233, 4096, %s1231, %s1216, 128, 128, 8
        $region44: #{tpu_custom_call.1} parent=35 // pred_fallthru
          _
      $region36: #{tpu_custom_call.1} parent=5 // pred_fallthru
        _
      %p1239 = scmp.le.s32.totalorder 2, %s16
      // Predicated region
      $region45: #{tpu_custom_call.1} parent=5 // pred_check
        %p1240 = pneg %p1239
      $region46: #{tpu_custom_call.1} parent=5 // pred_check_branch
        %1242 = sbr.rel (%p1240) target = $region48
      $region47: #{tpu_custom_call.1} parent=5 // pred_region
        %s1243 = ssub.s32 %s16, 2
        // Predicated region
        $region49: #{tpu_custom_call.1} parent=47 // pred_check
          %p1244 = pneg %p155
        $region50: #{tpu_custom_call.1} parent=47 // pred_check_branch
          %1246 = sbr.rel (%p1244) target = $region52
        $region51: #{tpu_custom_call.1} parent=47 // pred_region
          %s1247 = sand.u32 %s140, 1
          %s1248 = scalar_lea.sflag [#allocation4], %s1247
          %s1249 = sand.u32 %s140, 1
          %s1250 = smul.addr %s1249, 256
          %s1251 = scalar_lea.vmem [#allocation5], %s1250
          %1252 = dma.done %s1248, 4096
        $region52: #{tpu_custom_call.1} parent=47 // pred_fallthru
          _
      $region48: #{tpu_custom_call.1} parent=5 // pred_fallthru
        _
    $region6: #{tpu_custom_call.1} parent=1 // loop_footer
      %s20 = sadd.s32 1, %s16
    $region7: #{tpu_custom_call.1} parent=1 // loop_footer_branch
      %15 = sbr.rel target = $region3
    $region8: #{tpu_custom_call.1} parent=1 // loop_exit
      _
    %1253 = vsyncpa [#allocation3], 1
    %s1254 = scalar_lea.sflag [#allocation3], 1
    %1255 = vsyncpa %s1254, 1
    %1256 = vsyncpa [#allocation4], 1
    %s1257 = scalar_lea.sflag [#allocation4], 1
    %1258 = vsyncpa %s1257, 1

</llo_original>
